<compile_context>
chip_gen: v5e
topology: v5e:2x2
jax: 0.10.0
libtpu: 0.0.40
codegen_flags: <defaults>
</compile_context>

<pallas_src>
import functools

import jax
import jax.numpy as jnp
from jax.experimental import pallas as pl
from jax.experimental.pallas import tpu as pltpu


# ----------------------------------------------------------------------------
# Kernels
# ----------------------------------------------------------------------------

def _mask_x(x, n_idx, tile_n, n_total):
    col = jax.lax.broadcasted_iota(jnp.int32, x.shape, 1) + n_idx * tile_n
    return jnp.where(col < n_total, x, jnp.zeros_like(x))


def _gram_stats_kernel(x_ref, s_ref, g_ref, *, n_total, tile_n, needs_mask):
    # x_ref : (C_in, tile_n)    current (batch, N) tile
    # s_ref : (C_in, 1)         per-batch accumulator of sum_cols(x)
    # g_ref : (C_in, C_in)      per-batch accumulator of x @ x^T
    n = pl.program_id(1)

    @pl.when(n == 0)
    def _():
        s_ref[...] = jnp.zeros_like(s_ref)
        g_ref[...] = jnp.zeros_like(g_ref)

    x = x_ref[...]
    if needs_mask:
        x = _mask_x(x, n, tile_n, n_total)

    s_ref[...] += jnp.sum(x.astype(jnp.float32), axis=-1, keepdims=True)
    # x @ x^T without materialising a transpose (contract lane dims of both).
    g_ref[...] += jax.lax.dot_general(
        x, x, dimension_numbers=(((1,), (1,)), ((), ())),
        preferred_element_type=jnp.float32)


def _matmul_stats_kernel(x_ref, w_ref, s_ref, q_ref, *, n_total, tile_n,
                         needs_mask):
    # x_ref : (C_in, tile_n)
    # w_ref : (C_out, C_in)     resident
    # s_ref : (C_out, 1)        per-batch accumulator of sum(y)
    # q_ref : (C_out, 1)        per-batch accumulator of sum(y*y)
    n = pl.program_id(1)

    @pl.when(n == 0)
    def _():
        s_ref[...] = jnp.zeros_like(s_ref)
        q_ref[...] = jnp.zeros_like(q_ref)

    x = x_ref[...]
    if needs_mask:
        x = _mask_x(x, n, tile_n, n_total)

    y = jnp.dot(w_ref[...], x, preferred_element_type=jnp.float32)
    s_ref[...] += jnp.sum(y, axis=-1, keepdims=True)
    q_ref[...] += jnp.sum(y * y, axis=-1, keepdims=True)


def _apply_kernel(*refs, with_scale, with_relu):
    # with_scale: (x_ref, w_ref, scale_ref, shift_ref, o_ref)
    # else      : (x_ref, w_ref, shift_ref, o_ref)   -- shift is the conv bias
    if with_scale:
        x_ref, w_ref, scale_ref, shift_ref, o_ref = refs
    else:
        x_ref, w_ref, shift_ref, o_ref = refs

    y = jnp.dot(w_ref[...], x_ref[...], preferred_element_type=jnp.float32)
    if with_scale:
        y = y * scale_ref[...] + shift_ref[...]
    else:
        y = y + shift_ref[...]
    if with_relu:
        y = jnp.maximum(y, 0.0)
    o_ref[...] = y.astype(o_ref.dtype)


# ----------------------------------------------------------------------------
# Tiling / VMEM planning
# ----------------------------------------------------------------------------

def _choose_tile_n(n, per_col_bytes, budget_bytes):
    """Largest multiple-of-128 N tile whose per-column footprint fits `budget`;
    full N if N already fits."""
    t = max(budget_bytes, 0) // max(per_col_bytes, 1)
    t = (t // 128) * 128
    t = int(max(min(t, 8192), 128))
    return n if n <= t else t


def _vmem_limit(footprint_bytes):
    """Explicit scoped-VMEM limit: actual footprint + headroom for compiler
    internal scratch, floored at 16 MiB and capped below v7x's 64 MiB physical."""
    return int(min(max(footprint_bytes * 3 // 2 + (4 << 20), 16 << 20), 56 << 20))


# ----------------------------------------------------------------------------
# Forward wrapper
# ----------------------------------------------------------------------------

def conv1d_forward(x, weight, bias, gamma=None, beta=None,
                   with_bn=True, with_relu=True, eps=1e-5,
                   out_dtype=None, vmem_budget_bytes=24 << 20):
    """Pointwise Conv1d (+ train-mode BatchNorm1d) (+ ReLU).

    x: (B, C_in, N), weight: (C_out, C_in), bias/gamma/beta: (C_out,).
    Returns (B, C_out, N) in `out_dtype` (defaults to x.dtype).
    """
    B, C_in, N = x.shape
    C_out = weight.shape[0]
    out_dtype = out_dtype or x.dtype

    xb = jnp.dtype(x.dtype).itemsize
    wb = jnp.dtype(weight.dtype).itemsize
    ob = jnp.dtype(out_dtype).itemsize

    # ---------------- pass 1: BN statistics -> fused (scale, shift) ----------
    if with_bn:
        m_total = B * N
        use_gram = C_out >= C_in  # Gram form cheaper when the layer expands.

        if use_gram:
            resident = 2 * (C_in * C_in + C_in) * 4          # dbl-buffered accumulators
            tile_s = _choose_tile_n(N, 2 * C_in * xb, vmem_budget_bytes - resident)
            grid_s = (B, pl.cdiv(N, tile_s))
            needs_mask = (N % tile_s) != 0
            x_spec = pl.BlockSpec((pl.Squeezed(), C_in, tile_s),
                                  lambda b, n: (b, 0, n))
            s_spec = pl.BlockSpec((pl.Squeezed(), C_in, 1), lambda b, n: (b, 0, 0))
            g_spec = pl.BlockSpec((pl.Squeezed(), C_in, C_in), lambda b, n: (b, 0, 0))
            fp = resident + 2 * C_in * tile_s * xb
            s_b, g_b = pl.pallas_call(
                functools.partial(_gram_stats_kernel, n_total=N, tile_n=tile_s,
                                  needs_mask=needs_mask),
                out_shape=(jax.ShapeDtypeStruct((B, C_in, 1), jnp.float32),
                           jax.ShapeDtypeStruct((B, C_in, C_in), jnp.float32)),
                grid=grid_s,
                in_specs=[x_spec],
                out_specs=(s_spec, g_spec),
                compiler_params=pltpu.CompilerParams(
                    dimension_semantics=("parallel", "arbitrary"),
                    vmem_limit_bytes=_vmem_limit(fp)),
            )(x)
            w32 = weight.astype(jnp.float32)
            s = jnp.sum(s_b, axis=0)                                  # (C_in, 1)
            g = jnp.sum(g_b, axis=0)                                  # (C_in, C_in)
            ysum = w32 @ s                                            # (C_out, 1)
            ysq = jnp.sum((w32 @ g) * w32, axis=1, keepdims=True)     # (C_out, 1)
        else:
            resident = 2 * C_out * C_in * wb + 2 * 2 * C_out * 4
            tile_s = _choose_tile_n(N, 2 * C_in * xb, vmem_budget_bytes - resident)
            grid_s = (B, pl.cdiv(N, tile_s))
            needs_mask = (N % tile_s) != 0
            x_spec = pl.BlockSpec((pl.Squeezed(), C_in, tile_s),
                                  lambda b, n: (b, 0, n))
            w_spec = pl.BlockSpec((C_out, C_in), lambda b, n: (0, 0))
            p_spec = pl.BlockSpec((pl.Squeezed(), C_out, 1), lambda b, n: (b, 0, 0))
            fp = resident + 2 * C_in * tile_s * xb
            ys_b, yq_b = pl.pallas_call(
                functools.partial(_matmul_stats_kernel, n_total=N, tile_n=tile_s,
                                  needs_mask=needs_mask),
                out_shape=(jax.ShapeDtypeStruct((B, C_out, 1), jnp.float32),
                           jax.ShapeDtypeStruct((B, C_out, 1), jnp.float32)),
                grid=grid_s,
                in_specs=[x_spec, w_spec],
                out_specs=(p_spec, p_spec),
                compiler_params=pltpu.CompilerParams(
                    dimension_semantics=("parallel", "arbitrary"),
                    vmem_limit_bytes=_vmem_limit(fp)),
            )(x, weight)
            ysum = jnp.sum(ys_b, axis=0)
            ysq = jnp.sum(yq_b, axis=0)

        # Tiny fold in plain JAX (O(C_out)): biased variance as in BN training.
        mean = ysum / float(m_total)
        var = jnp.maximum(ysq / float(m_total) - mean * mean, 0.0)
        scale = gamma.astype(jnp.float32).reshape(C_out, 1) * jax.lax.rsqrt(var + eps)
        shift = beta.astype(jnp.float32).reshape(C_out, 1) - mean * scale
        # Conv bias cancels exactly under train-mode BN normalisation -> skipped.
        with_scale = True
    else:
        scale = None
        shift = bias.astype(jnp.float32).reshape(C_out, 1)
        with_scale = False

    # ---------------- pass 2: y = W @ x, affine, ReLU ------------------------
    n_params = 2 if with_scale else 1
    resident_a = 2 * C_out * C_in * wb + 2 * n_params * C_out * 4
    tile_a = _choose_tile_n(N, 2 * (C_in * xb + C_out * ob),
                            vmem_budget_bytes - resident_a)
    grid_a = (B, pl.cdiv(N, tile_a))

    x_spec = pl.BlockSpec((pl.Squeezed(), C_in, tile_a), lambda b, n: (b, 0, n))
    w_spec = pl.BlockSpec((C_out, C_in), lambda b, n: (0, 0))
    p_spec = pl.BlockSpec((C_out, 1), lambda b, n: (0, 0))
    o_spec = pl.BlockSpec((pl.Squeezed(), C_out, tile_a), lambda b, n: (b, 0, n))

    if with_scale:
        in_specs = [x_spec, w_spec, p_spec, p_spec]
        args = (x, weight, scale, shift)
    else:
        in_specs = [x_spec, w_spec, p_spec]
        args = (x, weight, shift)

    fp_a = resident_a + 2 * tile_a * (C_in * xb + C_out * ob)
    out = pl.pallas_call(
        functools.partial(_apply_kernel, with_scale=with_scale,
                          with_relu=with_relu),
        out_shape=jax.ShapeDtypeStruct((B, C_out, N), out_dtype),
        grid=grid_a,
        in_specs=in_specs,
        out_specs=o_spec,
        compiler_params=pltpu.CompilerParams(
            dimension_semantics=("parallel", "parallel"),
            vmem_limit_bytes=_vmem_limit(fp_a)),
    )(*args)
    return out


def init_params(key, input_dim, output_dim):
    """Deterministic init mirroring nn.Conv1d(kernel_size=1) + nn.BatchNorm1d."""
    kw, kb = jax.random.split(key)
    bound = 1.0 / (input_dim ** 0.5)
    weight = jax.random.uniform(kw, (output_dim, input_dim), jnp.float32,
                                minval=-bound, maxval=bound)
    bias = jax.random.uniform(kb, (output_dim,), jnp.float32,
                              minval=-bound, maxval=bound)
    gamma = jnp.ones((output_dim,), jnp.float32)
    beta = jnp.zeros((output_dim,), jnp.float32)
    return weight, bias, gamma, beta


# ----------------------------------------------------------------------------
# Demo / checks
# ----------------------------------------------------------------------------

def _reference(x, weight, bias, gamma, beta, with_bn, with_relu, eps=1e-5):
    y = jnp.einsum('oc,bcn->bon', weight, x) + bias[None, :, None]
    if with_bn:
        mean = jnp.mean(y, axis=(0, 2), keepdims=True)
        var = jnp.mean(jnp.square(y - mean), axis=(0, 2), keepdims=True)
        y = (y - mean) * jax.lax.rsqrt(var + eps)
        y = y * gamma[None, :, None] + beta[None, :, None]
    if with_relu:
        y = jnp.maximum(y, 0.0)
    return y


if __name__ == "__main__":
    key = jax.random.PRNGKey(0)
    k_x, k_p, k_p2 = jax.random.split(key, 3)

    B, C_in, N = 2, 4, 16
    C_out = 8

    x = jax.random.normal(k_x, (B, C_in, N), dtype=jnp.float32)
    weight, bias, gamma, beta = init_params(k_p, C_in, C_out)

    # --- BN + ReLU, expanding layer (C_out >= C_in -> Gram stats path) ------
    out = jax.block_until_ready(
        conv1d_forward(x, weight, bias, gamma, beta, with_bn=True, with_relu=True))
    ref = _reference(x, weight, bias, gamma, beta, True, True)
    assert out.shape == (B, C_out, N), out.shape
    assert out.dtype == jnp.float32, out.dtype
    assert jnp.allclose(out, ref, atol=1e-4, rtol=1e-4)

    # --- plain conv (+bias), no BN / no ReLU --------------------------------
    out2 = jax.block_until_ready(
        conv1d_forward(x, weight, bias, gamma, beta, with_bn=False, with_relu=False))
    ref2 = _reference(x, weight, bias, gamma, beta, False, False)
    assert jnp.allclose(out2, ref2, atol=1e-4, rtol=1e-4)

    # --- BN + ReLU, shrinking layer (C_in > C_out -> matmul stats path) -----
    C_in2, C_out2 = 8, 4
    x2 = jax.random.normal(k_x, (B, C_in2, N), dtype=jnp.float32)
    w2, b2, g2, be2 = init_params(k_p2, C_in2, C_out2)
    out3 = jax.block_until_ready(
        conv1d_forward(x2, w2, b2, g2, be2, with_bn=True, with_relu=True))
    ref3 = _reference(x2, w2, b2, g2, be2, True, True)
    assert jnp.allclose(out3, ref3, atol=1e-4, rtol=1e-4)

    # --- bf16 data path (stats / accumulation stay f32) ---------------------
    out4 = jax.block_until_ready(
        conv1d_forward(x.astype(jnp.bfloat16), weight.astype(jnp.bfloat16),
                       bias, gamma, beta, with_bn=True, with_relu=True))
    assert out4.dtype == jnp.bfloat16, out4.dtype
    assert jnp.allclose(out4.astype(jnp.float32), ref, atol=0.15, rtol=0.15)

    print("KERNEL_OK")
</pallas_src>

<mosaic_0001>
module attributes {stable_mosaic.version = 11 : i64} {
  func.func @_gram_stats_kernel(%arg0: i32, %arg1: i32, %arg2: memref<1x4x16xf32, #tpu.memory_space<vmem>>, %arg3: memref<1x4x1xf32, #tpu.memory_space<vmem>>, %arg4: memref<1x4x4xf32, #tpu.memory_space<vmem>>) attributes {dimension_semantics = [#tpu.dimension_semantics<parallel>, #tpu.dimension_semantics<arbitrary>], iteration_bounds = array<i64: 2, 1>, scalar_prefetch = 0 : i64, scratch_operands = 0 : i64, tpu.core_type = #tpu.core_type<tc>, window_params = [{transform_indices = @transform_0, window_bounds = array<i64: 1, 4, 16>}, {transform_indices = @transform_1, window_bounds = array<i64: 1, 4, 1>}, {transform_indices = @transform_2, window_bounds = array<i64: 1, 4, 4>}]} {
    %c0_i32 = arith.constant 0 : i32
    %0 = arith.cmpi eq, %arg1, %c0_i32 : i32
    %1 = arith.extui %0 : i1 to i32
    %c0_i32_0 = arith.constant 0 : i32
    %2 = arith.cmpi ne, %1, %c0_i32_0 : i32
    scf.if %2 {
      %cst_16 = arith.constant 0.000000e+00 : f32
      %20 = vector.broadcast %cst_16 : f32 to vector<4x1xf32>
      %c0_17 = arith.constant 0 : index
      %c0_18 = arith.constant 0 : index
      %c0_19 = arith.constant 0 : index
      %21 = vector.load %arg3[%c0_17, %c0_18, %c0_19] : memref<1x4x1xf32, #tpu.memory_space<vmem>>, vector<1x4x1xf32>
      %22 = vector.shape_cast %21 : vector<1x4x1xf32> to vector<4x1xf32>
      %23 = vector.shape_cast %20 : vector<4x1xf32> to vector<1x4x1xf32>
      tpu.vector_store %arg3[%c0_17, %c0_18, %c0_19], %23 {strides = array<i32>} : memref<1x4x1xf32, #tpu.memory_space<vmem>>, vector<1x4x1xf32>,
      %cst_20 = arith.constant 0.000000e+00 : f32
      %24 = vector.broadcast %cst_20 : f32 to vector<4x4xf32>
      %c0_21 = arith.constant 0 : index
      %c0_22 = arith.constant 0 : index
      %c0_23 = arith.constant 0 : index
      %25 = vector.load %arg4[%c0_21, %c0_22, %c0_23] : memref<1x4x4xf32, #tpu.memory_space<vmem>>, vector<1x4x4xf32>
      %26 = vector.shape_cast %25 : vector<1x4x4xf32> to vector<4x4xf32>
      %27 = vector.shape_cast %24 : vector<4x4xf32> to vector<1x4x4xf32>
      tpu.vector_store %arg4[%c0_21, %c0_22, %c0_23], %27 {strides = array<i32>} : memref<1x4x4xf32, #tpu.memory_space<vmem>>, vector<1x4x4xf32>,
    } else {
    }
    %c0 = arith.constant 0 : index
    %c0_1 = arith.constant 0 : index
    %c0_2 = arith.constant 0 : index
    %3 = vector.load %arg2[%c0, %c0_1, %c0_2] : memref<1x4x16xf32, #tpu.memory_space<vmem>>, vector<1x4x16xf32>
    %4 = vector.shape_cast %3 : vector<1x4x16xf32> to vector<4x16xf32>
    %c0_3 = arith.constant 0 : index
    %c0_4 = arith.constant 0 : index
    %c0_5 = arith.constant 0 : index
    %5 = vector.load %arg3[%c0_3, %c0_4, %c0_5] : memref<1x4x1xf32, #tpu.memory_space<vmem>>, vector<1x4x1xf32>
    %6 = vector.shape_cast %5 : vector<1x4x1xf32> to vector<4x1xf32>
    %cst = arith.constant dense<0.000000e+00> : vector<4xf32>
    %7 = vector.multi_reduction <add>, %4, %cst [1] : vector<4x16xf32> to vector<4xf32>
    %8 = vector.shape_cast %7 : vector<4xf32> to vector<4x1xf32>
    %9 = arith.addf %6, %8 : vector<4x1xf32>
    %c0_6 = arith.constant 0 : index
    %c0_7 = arith.constant 0 : index
    %c0_8 = arith.constant 0 : index
    %10 = vector.load %arg3[%c0_6, %c0_7, %c0_8] : memref<1x4x1xf32, #tpu.memory_space<vmem>>, vector<1x4x1xf32>
    %11 = vector.shape_cast %10 : vector<1x4x1xf32> to vector<4x1xf32>
    %12 = vector.shape_cast %9 : vector<4x1xf32> to vector<1x4x1xf32>
    tpu.vector_store %arg3[%c0_6, %c0_7, %c0_8], %12 {strides = array<i32>} : memref<1x4x1xf32, #tpu.memory_space<vmem>>, vector<1x4x1xf32>,
    %c0_9 = arith.constant 0 : index
    %c0_10 = arith.constant 0 : index
    %c0_11 = arith.constant 0 : index
    %13 = vector.load %arg4[%c0_9, %c0_10, %c0_11] : memref<1x4x4xf32, #tpu.memory_space<vmem>>, vector<1x4x4xf32>
    %14 = vector.shape_cast %13 : vector<1x4x4xf32> to vector<4x4xf32>
    %cst_12 = arith.constant dense<0.000000e+00> : vector<4x4xf32>
    %15 = tpu.matmul %4, %4, %cst_12 {dimension_numbers = #tpu.dot_dimension_numbers<[1], [1], [0], [0], [0, 0, 1, 0], [], []>} : vector<4x16xf32>, vector<4x16xf32>, vector<4x4xf32> -> vector<4x4xf32>
    %16 = arith.addf %14, %15 : vector<4x4xf32>
    %c0_13 = arith.constant 0 : index
    %c0_14 = arith.constant 0 : index
    %c0_15 = arith.constant 0 : index
    %17 = vector.load %arg4[%c0_13, %c0_14, %c0_15] : memref<1x4x4xf32, #tpu.memory_space<vmem>>, vector<1x4x4xf32>
    %18 = vector.shape_cast %17 : vector<1x4x4xf32> to vector<4x4xf32>
    %19 = vector.shape_cast %16 : vector<4x4xf32> to vector<1x4x4xf32>
    tpu.vector_store %arg4[%c0_13, %c0_14, %c0_15], %19 {strides = array<i32>} : memref<1x4x4xf32, #tpu.memory_space<vmem>>, vector<1x4x4xf32>,
    return
  }
  func.func @transform_0(%arg0: i32, %arg1: i32) -> (i32, i32, i32) {
    %c0_i32 = arith.constant 0 : i32
    %c0_i32_0 = arith.constant 0 : i32
    return %arg0, %c0_i32, %arg1 : i32, i32, i32
  }
  func.func @transform_1(%arg0: i32, %arg1: i32) -> (i32, i32, i32) {
    %c0_i32 = arith.constant 0 : i32
    %c0_i32_0 = arith.constant 0 : i32
    %c0_i32_1 = arith.constant 0 : i32
    return %arg0, %c0_i32, %c0_i32_0 : i32, i32, i32
  }
  func.func @transform_2(%arg0: i32, %arg1: i32) -> (i32, i32, i32) {
    %c0_i32 = arith.constant 0 : i32
    %c0_i32_0 = arith.constant 0 : i32
    %c0_i32_1 = arith.constant 0 : i32
    return %arg0, %c0_i32, %c0_i32_0 : i32, i32, i32
  }
}

</mosaic_0001>

<llo_original>
// kernel: tpu_custom_call.1
$region0: #{tpu_custom_call.1}
  #allocation0 [shape = 'u32[]', space=smem, size = 0x4, offset = 0x4, fixed_abs, tag = 'smem constant byte address 0x4 - core index']
  #allocation1 [shape = 'u32[72,128]{1,0:T(1,128)}', space=vmem, size = 0x9000, scoped, tag = 'internal scratch']
  %s0 = inlined_call_operand.hbm [shape: f32[2,4,16], index: 0, kind: input, shape index: {}]
  %s1 = inlined_call_operand.vmem [shape: f32[2,4,1], index: 1, kind: output, shape index: {0}]
  %s2 = inlined_call_operand.hbm [shape: f32[2,4,4], index: 2, kind: output, shape index: {1}]
  %3 = xla_tuple %s1, %s2
  %s4 = sld [smem:[#allocation0]]
  $region53: #{tpu_custom_call.1} parent=0
    _
  %s6 = ssub.s32 1, %s4
  %s7 = scalar_select 0, %s6, %s4
  $region1: #{tpu_custom_call.1} parent=0
    #allocation2 [shape = 'u8[4096]{0}', space=vmem, size = 0x1000, scoped, tag = 'input window, operand 0']
    #allocation3 [shape = 's32[2]{0}', space=sflag, size = 0x8, scoped, tag = 'scoped memory for tpu_custom_call.1']
    #allocation4 [shape = 's32[2]{0}', space=sflag, size = 0x8, scoped, tag = 'scoped memory for tpu_custom_call.1']
    #allocation5 [shape = 'u8[4096]{0}', space=vmem, size = 0x1000, scoped, tag = 'output window, operand 1']
    %8 = vsyncpa [#allocation3], 0
    %s9 = scalar_lea.sflag [#allocation3], 1
    %10 = vsyncpa %s9, 0
    %11 = vsyncpa [#allocation4], 0
    %s12 = scalar_lea.sflag [#allocation4], 1
    %13 = vsyncpa %s12, 0
    loop: start=0, step=1, limit=4
    $region2: #{tpu_custom_call.1} parent=1 // loop_pre_header
      _
    $region3: #{tpu_custom_call.1} parent=1 // loop_header
      %s15 = sphi 0, %s19
      %p16 = scmp.ge.s32.totalorder %s15, 4
      %s22 = sphi 0, %s34
      %s23 = sphi 0, %s30
      %s24 = sphi 0, %s22
      %s25 = sphi 0, %s23
      %s26 = sphi 0, %s24
      %s27 = sphi 0, %s25
      %s39 = sphi 0, %s41
      %s42 = sphi 0, %s39
      %s43 = sphi 0, %s42
      %s59 = sphi 0, %s43
      %s65 = sphi 0, %s67
      %s68 = sphi 0, %s65
      %s69 = sphi 0, %s68
      %s85 = sphi 0, %s69
      %s91 = sphi 0, %s93
      %s94 = sphi 0, %s91
      %s95 = sphi 0, %s94
      %s111 = sphi 0, %s95
    $region4: #{tpu_custom_call.1} parent=1 // loop_header_branch
      %18 = sbr.rel (%p16) target = $region8
    $region5: #{tpu_custom_call.1} parent=1 // loop_body
      %s20 = ssub.s32 %s15, 1
      %s21 = ssub.s32 %s15, 2
      %s28 = sadd.s32 1, %s23
      %p29 = scmp.ge.s32.totalorder %s28, 1
      %s30 = scalar_select %p29, 0, %s28
      %s31 = sadd.s32 1, %s22
      %s32 = scalar_select %p29, %s31, %s22
      %p33 = scmp.ge.s32.totalorder %s32, 2
      %s34 = scalar_select %p33, 0, %s32
      %s35 = ssub.s32 %s22, %s34
      %s36 = ssub.s32 %s23, %s30
      %s37 = sor.u32 %s35, %s36
      %p38 = scmp.eq.s32.totalorder %s37, 0
      %s40 = sadd.s32 %s39, 1
      %s41 = scalar_select %p38, %s39, %s40
      %p44 = pneg %p38
      %p45 = scmp.eq.s32.totalorder %s15, 1
      %p46 = por %p44, %p45
      %p47 = scmp.ne.s32.totalorder %s39, %s42
      %p48 = scmp.eq.s32.totalorder %s15, 0
      %p49 = por %p47, %p48
      %p50 = scmp.ne.s32.totalorder %s39, %s42
      %p51 = scmp.eq.s32.totalorder %s20, 1
      %p52 = por %p50, %p51
      %p53 = scmp.ne.s32.totalorder %s42, %s43
      %p54 = scmp.eq.s32.totalorder %s20, 0
      %p55 = por %p53, %p54
      %p56 = scmp.ne.s32.totalorder %s42, %s43
      %p57 = scmp.eq.s32.totalorder %s21, 1
      %p58 = por %p56, %p57
      %p60 = scmp.ne.s32.totalorder %s43, %s59
      %p61 = scmp.eq.s32.totalorder %s21, 0
      %p62 = por %p60, %p61
      %s63 = ssub.s32 %s22, %s34
      %p64 = scmp.eq.s32.totalorder %s63, 0
      %s66 = sadd.s32 %s65, 1
      %s67 = scalar_select %p64, %s65, %s66
      %p70 = pneg %p64
      %p71 = scmp.eq.s32.totalorder %s15, 1
      %p72 = por %p70, %p71
      %p73 = scmp.ne.s32.totalorder %s65, %s68
      %p74 = scmp.eq.s32.totalorder %s15, 0
      %p75 = por %p73, %p74
      %p76 = scmp.ne.s32.totalorder %s65, %s68
      %p77 = scmp.eq.s32.totalorder %s20, 1
      %p78 = por %p76, %p77
      %p79 = scmp.ne.s32.totalorder %s68, %s69
      %p80 = scmp.eq.s32.totalorder %s20, 0
      %p81 = por %p79, %p80
      %p82 = scmp.ne.s32.totalorder %s68, %s69
      %p83 = scmp.eq.s32.totalorder %s21, 1
      %p84 = por %p82, %p83
      %p86 = scmp.ne.s32.totalorder %s69, %s85
      %p87 = scmp.eq.s32.totalorder %s21, 0
      %p88 = por %p86, %p87
      %s89 = ssub.s32 %s22, %s34
      %p90 = scmp.eq.s32.totalorder %s89, 0
      %s92 = sadd.s32 %s91, 1
      %s93 = scalar_select %p90, %s91, %s92
      %p96 = pneg %p90
      %p97 = scmp.eq.s32.totalorder %s15, 1
      %p98 = por %p96, %p97
      %p99 = scmp.ne.s32.totalorder %s91, %s94
      %p100 = scmp.eq.s32.totalorder %s15, 0
      %p101 = por %p99, %p100
      %p102 = scmp.ne.s32.totalorder %s91, %s94
      %p103 = scmp.eq.s32.totalorder %s20, 1
      %p104 = por %p102, %p103
      %p105 = scmp.ne.s32.totalorder %s94, %s95
      %p106 = scmp.eq.s32.totalorder %s20, 0
      %p107 = por %p105, %p106
      %p108 = scmp.ne.s32.totalorder %s94, %s95
      %p109 = scmp.eq.s32.totalorder %s21, 1
      %p110 = por %p108, %p109
      %p112 = scmp.ne.s32.totalorder %s95, %s111
      %p113 = scmp.eq.s32.totalorder %s21, 0
      %p114 = por %p112, %p113
      %p115 = scmp.le.s32.totalorder 1, %s15
      %p116 = scmp.lt.s32.totalorder %s15, 3
      %p117 = pnand %p115, %p116
      %p118 = pneg %p117
      // Predicated region
      $region9: #{tpu_custom_call.1} parent=5 // pred_check
        _
      $region10: #{tpu_custom_call.1} parent=5 // pred_check_branch
        %120 = sbr.rel (%p117) target = $region12
      $region11: #{tpu_custom_call.1} parent=5 // pred_region
        %s121 = ssub.s32 %s15, 1
      $region12: #{tpu_custom_call.1} parent=5 // pred_fallthru
        _
      %p122 = scmp.lt.s32.totalorder %s15, 2
      // Predicated region
      $region13: #{tpu_custom_call.1} parent=5 // pred_check
        %p123 = pneg %p122
      $region14: #{tpu_custom_call.1} parent=5 // pred_check_branch
        %125 = sbr.rel (%p123) target = $region16
      $region15: #{tpu_custom_call.1} parent=5 // pred_region
        // Predicated region
        $region17: #{tpu_custom_call.1} parent=15 // pred_check
          %p126 = pneg %p49
        $region18: #{tpu_custom_call.1} parent=15 // pred_check_branch
          %128 = sbr.rel (%p126) target = $region20
        $region19: #{tpu_custom_call.1} parent=15 // pred_region
          %s129 = sand.u32 %s39, 1
          %s130 = scalar_lea.sflag [#allocation3], %s129
          %s131 = sand.u32 %s39, 1
          %s132 = smul.addr %s131, 4
          %s133 = scalar_lea.vmem [#allocation2], %s132
          %135 = vsyncadd %s130, 0
          %s136 = sadd.s32 %s23, %s22
          %s137 = smul.addr %s136, 4
          %s138 = scalar_lea.hbm %s0, %s137
          %s140 = sshll.u32 %s138, 4
          %s141 = int_to_ptr.hbm [resolvable:$true] %s140
          %s142 = sshll.u32 %s133, 4
          %s143 = int_to_ptr.vmem [resolvable:$true] %s142
          %145 = dma.hbm_to_vmem [thread:$0]  %s141, 64, %s143, %s130
        $region20: #{tpu_custom_call.1} parent=15 // pred_fallthru
          _
      $region16: #{tpu_custom_call.1} parent=5 // pred_fallthru
        _
      %p146 = scmp.le.s32.totalorder 1, %s15
      %p147 = scmp.lt.s32.totalorder %s15, 3
      %p148 = pnand %p146, %p147
      %p149 = pneg %p148
      // Predicated region
      $region21: #{tpu_custom_call.1} parent=5 // pred_check
        _
      $region22: #{tpu_custom_call.1} parent=5 // pred_check_branch
        %151 = sbr.rel (%p148) target = $region24
      $region23: #{tpu_custom_call.1} parent=5 // pred_region
        %s152 = ssub.s32 %s15, 1
        %s153 = sand.u32 %s42, 1
        %s154 = scalar_lea.sflag [#allocation3], %s153
        %s155 = sand.u32 %s42, 1
        %s156 = smul.addr %s155, 4
        %s157 = scalar_lea.vmem [#allocation2], %s156
        // Predicated region
        $region25: #{tpu_custom_call.1} parent=23 // pred_check
          %p158 = pneg %p55
        $region26: #{tpu_custom_call.1} parent=23 // pred_check_branch
          %160 = sbr.rel (%p158) target = $region28
        $region27: #{tpu_custom_call.1} parent=23 // pred_region
          %162 = dma.done %s154, 64
        $region28: #{tpu_custom_call.1} parent=23 // pred_fallthru
          _
        %s163 = sand.u32 %s42, 1
        %s164 = scalar_lea.sflag [#allocation3], %s163
        %s165 = sand.u32 %s42, 1
        %s166 = smul.addr %s165, 4
        %s167 = scalar_lea.vmem [#allocation2], %s166
        %p168 = pneg %p55
        %p169 = pneg %p52
        %p170 = pneg %p81
        %p171 = pneg %p78
        %p172 = scmp.lt.s32.totalorder %s24, 1
        %s173 = scalar_select %p172, %s24, 1
        %s174 = smul.addr %s173, 4
        %s175 = scalar_lea.vmem %s1, %s174
        %p176 = pneg %p107
        %p177 = pneg %p104
        %s178 = sand.u32 %s94, 1
        %s179 = scalar_lea.sflag [#allocation4], %s178
        %s180 = sand.u32 %s94, 1
        %s181 = smul.addr %s180, 4
        %s182 = scalar_lea.vmem [#allocation5], %s181
        %p183 = scmp.lt.s32.totalorder %s24, 1
        %s184 = scalar_select %p183, %s24, 1
        %s185 = smul.addr %s184, 4
        %s186 = scalar_lea.vmem %s1, %s185
        %p187 = scmp.eq.s32.totalorder %s25, 0
        // Predicated region
        $region29: #{tpu_custom_call.1} parent=23 // pred_check
          %p188 = pneg %p187
        $region30: #{tpu_custom_call.1} parent=23 // pred_check_branch
          %190 = sbr.rel (%p188) target = $region32
        $region31: #{tpu_custom_call.1} parent=23 // pred_region
          %vm191 = vcmask 3072
          %192 = vst.msk [vmem:[%s186] sm:$0xf] %vm191, 0.0
          %vm193 = vcmask 27648
          %194 = vst.msk [vmem:[%s182] sm:$0xf] %vm193, 0.0
        $region32: #{tpu_custom_call.1} parent=23 // pred_fallthru
          _
        %v195 = vld [vmem:[%s157] sm:$0xf]
        %v196 = vld [vmem:[%s186] sm:$0xf]
        %vm197 = vcmask 125952
        %v198 = vsel %vm197, %v195, 0.0
        %199 = vadd.xlane.f32.xlu0 %v198
        %v200 = vpop.xlane.xlu0 %199
        %v201 = vadd.f32 %v196, %v200
        %vm202 = vcmask 3072
        %203 = vst.msk [vmem:[%s186] sm:$0xf] %vm202, %v201
        %v204 = vld [vmem:[%s182] sm:$0xf]
        %vm205 = vcmask 130048
        %v207 = vsel %vm205, %v195, 0
        %209 = vmatpush.xpose.msra.mxu0 0.0
        %210 = vmatpush.xpose.msra.mxu0 0.0
        %211 = vmatpush.xpose.msra.mxu0 0.0
        %212 = vmatpush.xpose.msra.mxu0 0.0
        %213 = vmatpush.xpose.msra.mxu0 0.0
        %214 = vmatpush.xpose.msra.mxu0 0.0
        %215 = vmatpush.xpose.msra.mxu0 0.0
        %216 = vmatpush.xpose.msra.mxu0 0.0
        %217 = vmatpush.xpose.msra.mxu0 0.0
        %218 = vmatpush.xpose.msra.mxu0 0.0
        %219 = vmatpush.xpose.msra.mxu0 0.0
        %220 = vmatpush.xpose.msra.mxu0 0.0
        %221 = vmatpush.xpose.msra.mxu0 0.0
        %222 = vmatpush.xpose.msra.mxu0 0.0
        %223 = vmatpush.xpose.msra.mxu0 0.0
        %224 = vmatpush.xpose.msra.mxu0 %v207
        %225 = vmatmul.f32.gmra.mxu0 %v207
        %v226 = vpop.f32.mrf.mxu0
        %v227 = vadd.f32 0.0, %v226
        %228 = vdwg.mxu0
        %v229 = vadd.f32 %v204, %v227
        %vm230 = vcmask 27648
        %231 = vst.msk [vmem:[%s182] sm:$0xf] %vm230, %v229
        %p232 = scmp.lt.s32.totalorder %s24, 1
        %s233 = scalar_select %p232, %s24, 1
        %s234 = smul.addr %s233, 4
        %s235 = scalar_lea.vmem %s1, %s234
        %s236 = sand.u32 %s94, 1
        %s237 = scalar_lea.sflag [#allocation4], %s236
        %s238 = sand.u32 %s94, 1
        %s239 = smul.addr %s238, 4
        %s240 = scalar_lea.vmem [#allocation5], %s239
        // Predicated region
        $region33: #{tpu_custom_call.1} parent=23 // pred_check
          %p241 = pneg %p78
        $region34: #{tpu_custom_call.1} parent=23 // pred_check_branch
          %243 = sbr.rel (%p241) target = $region36
        $region35: #{tpu_custom_call.1} parent=23 // pred_region
          _
        $region36: #{tpu_custom_call.1} parent=23 // pred_fallthru
          _
        // Predicated region
        $region37: #{tpu_custom_call.1} parent=23 // pred_check
          %p244 = pneg %p104
        $region38: #{tpu_custom_call.1} parent=23 // pred_check_branch
          %246 = sbr.rel (%p244) target = $region40
        $region39: #{tpu_custom_call.1} parent=23 // pred_region
          %248 = vsyncadd %s237, 0
          %s249 = smul.addr %s24, 4
          %s250 = scalar_lea.hbm %s2, %s249
          %s252 = sshll.u32 %s240, 4
          %s253 = int_to_ptr.vmem [resolvable:$true] %s252
          %s254 = sshll.u32 %s250, 4
          %s255 = int_to_ptr.hbm [resolvable:$true] %s254
          %257 = dma.vmem_to_hbm [thread:$0]  %s253, 64, %s255, %s237
        $region40: #{tpu_custom_call.1} parent=23 // pred_fallthru
          _
      $region24: #{tpu_custom_call.1} parent=5 // pred_fallthru
        _
      %p258 = scmp.le.s32.totalorder 2, %s15
      // Predicated region
      $region41: #{tpu_custom_call.1} parent=5 // pred_check
        %p259 = pneg %p258
      $region42: #{tpu_custom_call.1} parent=5 // pred_check_branch
        %261 = sbr.rel (%p259) target = $region44
      $region43: #{tpu_custom_call.1} parent=5 // pred_region
        %s262 = ssub.s32 %s15, 2
        // Predicated region
        $region45: #{tpu_custom_call.1} parent=43 // pred_check
          %p263 = pneg %p84
        $region46: #{tpu_custom_call.1} parent=43 // pred_check_branch
          %265 = sbr.rel (%p263) target = $region48
        $region47: #{tpu_custom_call.1} parent=43 // pred_region
          %p266 = scmp.lt.s32.totalorder %s26, 1
          %s267 = scalar_select %p266, %s26, 1
          %s268 = smul.addr %s267, 4
          %s269 = scalar_lea.vmem %s1, %s268
        $region48: #{tpu_custom_call.1} parent=43 // pred_fallthru
          _
        // Predicated region
        $region49: #{tpu_custom_call.1} parent=43 // pred_check
          %p270 = pneg %p110
        $region50: #{tpu_custom_call.1} parent=43 // pred_check_branch
          %272 = sbr.rel (%p270) target = $region52
        $region51: #{tpu_custom_call.1} parent=43 // pred_region
          %s273 = sand.u32 %s95, 1
          %s274 = scalar_lea.sflag [#allocation4], %s273
          %s275 = sand.u32 %s95, 1
          %s276 = smul.addr %s275, 4
          %s277 = scalar_lea.vmem [#allocation5], %s276
          %279 = dma.done %s274, 64
        $region52: #{tpu_custom_call.1} parent=43 // pred_fallthru
          _
      $region44: #{tpu_custom_call.1} parent=5 // pred_fallthru
        _
    $region6: #{tpu_custom_call.1} parent=1 // loop_footer
      %s19 = sadd.s32 1, %s15
    $region7: #{tpu_custom_call.1} parent=1 // loop_footer_branch
      %14 = sbr.rel target = $region3
    $region8: #{tpu_custom_call.1} parent=1 // loop_exit
      _
    %280 = vsyncpa [#allocation3], 1
    %s281 = scalar_lea.sflag [#allocation3], 1
    %282 = vsyncpa %s281, 1
    %283 = vsyncpa [#allocation4], 1
    %s284 = scalar_lea.sflag [#allocation4], 1
    %285 = vsyncpa %s284, 1

</llo_original>
